<compile_context>
chip_gen: v6e
topology: v6e:2x2x1
jax: 0.10.0
libtpu: 0.0.40
codegen_flags: <defaults>
</compile_context>

<pallas_src>
import jax
import jax.numpy as jnp
from jax import lax
from jax.experimental import pallas as pl
from jax.experimental.pallas import tpu as pltpu

# ---- configuration mirroring the PyTorch script's module-level constants ----
N_LAYERS = 3
D = 784                 # = 28 * 28
NEURONS = 100           # logical hidden width (PyTorch)
NEURONS_PAD = 128       # lane-dense padded hidden width used inside the kernel
K = 10                  # logical output width
K_PAD = 128             # lane-dense padded output width used inside the kernel
BATCH = 32
EPS = 1e-5


# ----------------------------------------------------------------------------
# Shared in-kernel math (operates on plain arrays already loaded from VMEM refs)
# ----------------------------------------------------------------------------
def _forward_math(h, w0, b0, w1, b1, w2, b2):
    n = h.shape[0]                       # static Python int
    inv_n = 1.0 / n                      # compile-time constants
    inv_nm1 = 1.0 / (n - 1)              # torch.var default: unbiased (N-1)

    def hidden_layer(h, w, b):
        # Linear (MXU matmul) + bias
        h = jnp.dot(h, w, preferred_element_type=jnp.float32) + b
        # Fused batch statistics: one pass over h for both reductions.
        s1 = jnp.sum(h, axis=0, keepdims=True)
        s2 = jnp.sum(h * h, axis=0, keepdims=True)
        mean = s1 * inv_n
        var = (s2 - n * (mean * mean)) * inv_nm1
        inv_std = lax.rsqrt(var + EPS)   # EUP slot; broadcast-multiply epilogue
        h = (h - mean) * inv_std
        # ReLU
        return jnp.maximum(h, 0.0)

    h = hidden_layer(h, w0, b0)
    h = hidden_layer(h, w1, b1)
    # Final layer: plain Linear, no BN, no activation.
    return jnp.dot(h, w2, preferred_element_type=jnp.float32) + b2


# ----------------------------------------------------------------------------
# Kernels
# ----------------------------------------------------------------------------
def testnet_kernel(x_ref, w0_ref, b0_ref, w1_ref, b1_ref, w2_ref, b2_ref, o_ref):
    """Whole network, whole batch resident in VMEM; no grid, no pipelining."""
    out = _forward_math(x_ref[...], w0_ref[...], b0_ref[...], w1_ref[...],
                        b1_ref[...], w2_ref[...], b2_ref[...])
    o_ref[...] = out.astype(o_ref.dtype)


def testnet_group_kernel(x_ref, w0_ref, b0_ref, w1_ref, b1_ref, w2_ref, b2_ref,
                         o_ref):
    """One grid point = one independent BN batch of rows (block (1, B, D))."""
    out = _forward_math(x_ref[0], w0_ref[...], b0_ref[...], w1_ref[...],
                        b1_ref[...], w2_ref[...], b2_ref[...])
    o_ref[0] = out.astype(o_ref.dtype)


# ----------------------------------------------------------------------------
# Wrappers
# ----------------------------------------------------------------------------
def _vmem_spec():
    return pl.BlockSpec(memory_space=pltpu.MemorySpace.VMEM)


def testnet_forward(x, padded_params):
    """Single BN batch. x: any shape whose trailing dims flatten to D."""
    x2d = x.reshape(-1, D).astype(jnp.float32)
    batch = x2d.shape[0]
    ins = (x2d,) + tuple(padded_params)

    out = pl.pallas_call(
        testnet_kernel,
        out_shape=jax.ShapeDtypeStruct((batch, K_PAD), jnp.float32),
        in_specs=[_vmem_spec() for _ in ins],
        out_specs=_vmem_spec(),
    )(*ins)
    # Drop the zero-padded output lanes.
    return out[:, :K]


def testnet_forward_groups(x_groups, padded_params):
    """Many independent BN batches: grid over groups, 'parallel' semantics.

    x_groups: (G, B, ...) -> each group of B rows is normalized independently
    (equivalent to G separate calls of the PyTorch forward).
    """
    g_count = x_groups.shape[0]
    xg = x_groups.reshape(g_count, -1, D).astype(jnp.float32)
    b = xg.shape[1]
    w0p, b0p, w1p, b1p, w2p, b2p = padded_params

    def whole(a):
        nd = a.ndim
        return pl.BlockSpec(a.shape, lambda g, nd=nd: (0,) * nd)

    out = pl.pallas_call(
        testnet_group_kernel,
        out_shape=jax.ShapeDtypeStruct((g_count, b, K_PAD), jnp.float32),
        grid=(g_count,),
        in_specs=[pl.BlockSpec((1, b, D), lambda g: (g, 0, 0)),
                  whole(w0p), whole(b0p), whole(w1p), whole(b1p),
                  whole(w2p), whole(b2p)],
        out_specs=pl.BlockSpec((1, b, K_PAD), lambda g: (g, 0, 0)),
        compiler_params=pltpu.CompilerParams(
            dimension_semantics=("parallel",)),
    )(xg, w0p, b0p, w1p, b1p, w2p, b2p)
    return out[:, :, :K]


# ----------------------------------------------------------------------------
# Parameter handling
# ----------------------------------------------------------------------------
def init_params(key):
    """Deterministic init mimicking nn.Linear's U(-1/sqrt(fan_in), +1/sqrt(fan_in)).

    Weights stored pre-transposed as (in_features, out_features), logical sizes.
    """
    dims = [(D, NEURONS), (NEURONS, NEURONS), (NEURONS, K)]
    params = []
    for fan_in, fan_out in dims:
        key, kw, kb = jax.random.split(key, 3)
        bound = 1.0 / jnp.sqrt(fan_in)
        w = jax.random.uniform(kw, (fan_in, fan_out), jnp.float32, -bound, bound)
        b = jax.random.uniform(kb, (1, fan_out), jnp.float32, -bound, bound)
        params.append((w, b))
    return params


def pad_params(params):
    """Zero-pad hidden width to 128 and output width to 128 (lane-dense).

    Padded neurons stay exactly zero through Linear -> BN -> ReLU, so this is
    numerically equivalent to the unpadded network.
    """
    (w0, b0), (w1, b1), (w2, b2) = params

    def pad_to(a, rows, cols):
        out = jnp.zeros((rows, cols), a.dtype)
        return out.at[: a.shape[0], : a.shape[1]].set(a)

    return (
        pad_to(w0, D, NEURONS_PAD), pad_to(b0, 1, NEURONS_PAD),
        pad_to(w1, NEURONS_PAD, NEURONS_PAD), pad_to(b1, 1, NEURONS_PAD),
        pad_to(w2, NEURONS_PAD, K_PAD), pad_to(b2, 1, K_PAD),
    )


# ----------------------------------------------------------------------------
# Pure-JAX reference (unpadded params, literal transcription of the PyTorch fwd)
# ----------------------------------------------------------------------------
def testnet_forward_ref(x, params):
    h = x.reshape(-1, D).astype(jnp.float32)
    n = h.shape[0]
    for li, (w, b) in enumerate(params):
        h = h @ w + b
        if li != len(params) - 1:
            mean = jnp.mean(h, axis=0, keepdims=True)
            var = jnp.sum((h - mean) ** 2, axis=0, keepdims=True) / (n - 1)
            h = (h - mean) / jnp.sqrt(var + EPS)
            h = jnp.maximum(h, 0.0)
    return h


if __name__ == "__main__":
    key = jax.random.PRNGKey(0)
    key, kx, kp = jax.random.split(key, 3)

    # Input shaped like MNIST-style images; forward flattens to (-1, 784).
    x = jax.random.normal(kx, (BATCH, 1, 28, 28), dtype=jnp.float32)
    params = init_params(kp)
    padded = pad_params(params)

    # --- single-batch path (no grid, whole-problem VMEM resident) ---
    out = jax.block_until_ready(testnet_forward(x, padded))
    ref = testnet_forward_ref(x, params)
    assert out.shape == (BATCH, K)
    assert jnp.allclose(out, ref, atol=2e-4, rtol=2e-4), "single-batch mismatch"

    # --- grouped path (grid over independent BN batches, 'parallel') ---
    G = 4
    key, kxg = jax.random.split(key)
    xg = jax.random.normal(kxg, (G, BATCH, 1, 28, 28), dtype=jnp.float32)
    out_g = jax.block_until_ready(testnet_forward_groups(xg, padded))
    ref_g = jnp.stack([testnet_forward_ref(xg[g], params) for g in range(G)])
    assert out_g.shape == (G, BATCH, K)
    assert jnp.allclose(out_g, ref_g, atol=2e-4, rtol=2e-4), "grouped mismatch"

    # TODO(synk): optional bf16 weight storage for v6e/v7x MXU input (halves
    # weight DMA); kept f32 here to preserve tight reference tolerances.
    print("KERNEL_OK")
</pallas_src>

<mosaic_0001>
module attributes {stable_mosaic.version = 11 : i64} {
  func.func @testnet_kernel(%arg0: memref<32x784xf32, #tpu.memory_space<vmem>>, %arg1: memref<784x128xf32, #tpu.memory_space<vmem>>, %arg2: memref<1x128xf32, #tpu.memory_space<vmem>>, %arg3: memref<128x128xf32, #tpu.memory_space<vmem>>, %arg4: memref<1x128xf32, #tpu.memory_space<vmem>>, %arg5: memref<128x128xf32, #tpu.memory_space<vmem>>, %arg6: memref<1x128xf32, #tpu.memory_space<vmem>>, %arg7: memref<32x128xf32, #tpu.memory_space<vmem>>) attributes {dimension_semantics = [], scalar_prefetch = 0 : i64, scratch_operands = 0 : i64, tpu.core_type = #tpu.core_type<tc>} {
    %c0 = arith.constant 0 : index
    %c0_0 = arith.constant 0 : index
    %0 = vector.load %arg0[%c0, %c0_0] : memref<32x784xf32, #tpu.memory_space<vmem>>, vector<32x784xf32>
    %c0_1 = arith.constant 0 : index
    %c0_2 = arith.constant 0 : index
    %1 = vector.load %arg1[%c0_1, %c0_2] : memref<784x128xf32, #tpu.memory_space<vmem>>, vector<784x128xf32>
    %c0_3 = arith.constant 0 : index
    %c0_4 = arith.constant 0 : index
    %2 = vector.load %arg2[%c0_3, %c0_4] : memref<1x128xf32, #tpu.memory_space<vmem>>, vector<1x128xf32>
    %c0_5 = arith.constant 0 : index
    %c0_6 = arith.constant 0 : index
    %3 = vector.load %arg3[%c0_5, %c0_6] : memref<128x128xf32, #tpu.memory_space<vmem>>, vector<128x128xf32>
    %c0_7 = arith.constant 0 : index
    %c0_8 = arith.constant 0 : index
    %4 = vector.load %arg4[%c0_7, %c0_8] : memref<1x128xf32, #tpu.memory_space<vmem>>, vector<1x128xf32>
    %c0_9 = arith.constant 0 : index
    %c0_10 = arith.constant 0 : index
    %5 = vector.load %arg5[%c0_9, %c0_10] : memref<128x128xf32, #tpu.memory_space<vmem>>, vector<128x128xf32>
    %c0_11 = arith.constant 0 : index
    %c0_12 = arith.constant 0 : index
    %6 = vector.load %arg6[%c0_11, %c0_12] : memref<1x128xf32, #tpu.memory_space<vmem>>, vector<1x128xf32>
    %cst = arith.constant dense<0.000000e+00> : vector<32x128xf32>
    %7 = tpu.matmul %0, %1, %cst {dimension_numbers = #tpu.dot_dimension_numbers<[1], [0], [0], [1], [0, 0, 1, 1], [], []>} : vector<32x784xf32>, vector<784x128xf32>, vector<32x128xf32> -> vector<32x128xf32>
    %8 = vector.broadcast %2 : vector<1x128xf32> to vector<32x128xf32>
    %9 = arith.addf %7, %8 : vector<32x128xf32>
    %cst_13 = arith.constant dense<0.000000e+00> : vector<128xf32>
    %10 = vector.multi_reduction <add>, %9, %cst_13 [0] : vector<32x128xf32> to vector<128xf32>
    %11 = vector.shape_cast %10 : vector<128xf32> to vector<1x128xf32>
    %12 = arith.mulf %9, %9 : vector<32x128xf32>
    %cst_14 = arith.constant dense<0.000000e+00> : vector<128xf32>
    %13 = vector.multi_reduction <add>, %12, %cst_14 [0] : vector<32x128xf32> to vector<128xf32>
    %14 = vector.shape_cast %13 : vector<128xf32> to vector<1x128xf32>
    %cst_15 = arith.constant 3.125000e-02 : f32
    %15 = vector.broadcast %cst_15 : f32 to vector<1x128xf32>
    %16 = arith.mulf %11, %15 : vector<1x128xf32>
    %17 = arith.mulf %16, %16 : vector<1x128xf32>
    %cst_16 = arith.constant 3.200000e+01 : f32
    %18 = vector.broadcast %cst_16 : f32 to vector<1x128xf32>
    %19 = arith.mulf %18, %17 : vector<1x128xf32>
    %20 = arith.subf %14, %19 : vector<1x128xf32>
    %cst_17 = arith.constant 0.0322580636 : f32
    %21 = vector.broadcast %cst_17 : f32 to vector<1x128xf32>
    %22 = arith.mulf %20, %21 : vector<1x128xf32>
    %cst_18 = arith.constant 9.99999974E-6 : f32
    %23 = vector.broadcast %cst_18 : f32 to vector<1x128xf32>
    %24 = arith.addf %22, %23 : vector<1x128xf32>
    %25 = math.rsqrt %24 : vector<1x128xf32>
    %26 = vector.broadcast %16 : vector<1x128xf32> to vector<32x128xf32>
    %27 = arith.subf %9, %26 : vector<32x128xf32>
    %28 = vector.broadcast %25 : vector<1x128xf32> to vector<32x128xf32>
    %29 = arith.mulf %27, %28 : vector<32x128xf32>
    %cst_19 = arith.constant 0.000000e+00 : f32
    %30 = vector.broadcast %cst_19 : f32 to vector<32x128xf32>
    %31 = arith.maximumf %29, %30 : vector<32x128xf32>
    %cst_20 = arith.constant dense<0.000000e+00> : vector<32x128xf32>
    %32 = tpu.matmul %31, %3, %cst_20 {dimension_numbers = #tpu.dot_dimension_numbers<[1], [0], [0], [1], [0, 0, 1, 1], [], []>} : vector<32x128xf32>, vector<128x128xf32>, vector<32x128xf32> -> vector<32x128xf32>
    %33 = vector.broadcast %4 : vector<1x128xf32> to vector<32x128xf32>
    %34 = arith.addf %32, %33 : vector<32x128xf32>
    %cst_21 = arith.constant dense<0.000000e+00> : vector<128xf32>
    %35 = vector.multi_reduction <add>, %34, %cst_21 [0] : vector<32x128xf32> to vector<128xf32>
    %36 = vector.shape_cast %35 : vector<128xf32> to vector<1x128xf32>
    %37 = arith.mulf %34, %34 : vector<32x128xf32>
    %cst_22 = arith.constant dense<0.000000e+00> : vector<128xf32>
    %38 = vector.multi_reduction <add>, %37, %cst_22 [0] : vector<32x128xf32> to vector<128xf32>
    %39 = vector.shape_cast %38 : vector<128xf32> to vector<1x128xf32>
    %cst_23 = arith.constant 3.125000e-02 : f32
    %40 = vector.broadcast %cst_23 : f32 to vector<1x128xf32>
    %41 = arith.mulf %36, %40 : vector<1x128xf32>
    %42 = arith.mulf %41, %41 : vector<1x128xf32>
    %cst_24 = arith.constant 3.200000e+01 : f32
    %43 = vector.broadcast %cst_24 : f32 to vector<1x128xf32>
    %44 = arith.mulf %43, %42 : vector<1x128xf32>
    %45 = arith.subf %39, %44 : vector<1x128xf32>
    %cst_25 = arith.constant 0.0322580636 : f32
    %46 = vector.broadcast %cst_25 : f32 to vector<1x128xf32>
    %47 = arith.mulf %45, %46 : vector<1x128xf32>
    %cst_26 = arith.constant 9.99999974E-6 : f32
    %48 = vector.broadcast %cst_26 : f32 to vector<1x128xf32>
    %49 = arith.addf %47, %48 : vector<1x128xf32>
    %50 = math.rsqrt %49 : vector<1x128xf32>
    %51 = vector.broadcast %41 : vector<1x128xf32> to vector<32x128xf32>
    %52 = arith.subf %34, %51 : vector<32x128xf32>
    %53 = vector.broadcast %50 : vector<1x128xf32> to vector<32x128xf32>
    %54 = arith.mulf %52, %53 : vector<32x128xf32>
    %cst_27 = arith.constant 0.000000e+00 : f32
    %55 = vector.broadcast %cst_27 : f32 to vector<32x128xf32>
    %56 = arith.maximumf %54, %55 : vector<32x128xf32>
    %cst_28 = arith.constant dense<0.000000e+00> : vector<32x128xf32>
    %57 = tpu.matmul %56, %5, %cst_28 {dimension_numbers = #tpu.dot_dimension_numbers<[1], [0], [0], [1], [0, 0, 1, 1], [], []>} : vector<32x128xf32>, vector<128x128xf32>, vector<32x128xf32> -> vector<32x128xf32>
    %58 = vector.broadcast %6 : vector<1x128xf32> to vector<32x128xf32>
    %59 = arith.addf %57, %58 : vector<32x128xf32>
    %c0_29 = arith.constant 0 : index
    %c0_30 = arith.constant 0 : index
    %60 = vector.load %arg7[%c0_29, %c0_30] : memref<32x128xf32, #tpu.memory_space<vmem>>, vector<32x128xf32>
    tpu.vector_store %arg7[%c0_29, %c0_30], %59 {strides = array<i32>} : memref<32x128xf32, #tpu.memory_space<vmem>>, vector<32x128xf32>,
    return
  }
}

</mosaic_0001>

<llo_original>
// kernel: tpu_custom_call.1
$region0: #{tpu_custom_call.1}
  #allocation0 [shape = 'u32[]', space=smem, size = 0x4, offset = 0x4, fixed_abs, tag = 'smem constant byte address 0x4 - core index']
  #allocation1 [shape = 'u32[144,128]{1,0:T(1,128)}', space=vmem, size = 0x12000, scoped, tag = 'internal scratch']
  %s0 = inlined_call_operand.hbm [shape: f32[32,784], index: 0, kind: input, shape index: {}]
  %s1 = inlined_call_operand.hbm [shape: f32[784,128], index: 1, kind: input, shape index: {}]
  %s2 = inlined_call_operand.vmem [shape: f32[1,128], index: 2, kind: input, shape index: {}]
  %s3 = inlined_call_operand.hbm [shape: f32[128,128], index: 3, kind: input, shape index: {}]
  %s4 = inlined_call_operand.vmem [shape: f32[1,128], index: 4, kind: input, shape index: {}]
  %s5 = inlined_call_operand.hbm [shape: f32[128,128], index: 5, kind: input, shape index: {}]
  %s6 = inlined_call_operand.vmem [shape: f32[1,128], index: 6, kind: input, shape index: {}]
  %s7 = inlined_call_operand.hbm [shape: f32[32,128], index: 7, kind: output, shape index: {}]
  %s8 = sld [smem:[#allocation0]]
  $region54: #{tpu_custom_call.1} parent=0
    _
  %s10 = ssub.s32 1, %s8
  %s11 = scalar_select 0, %s10, %s8
  $region1: #{tpu_custom_call.1} parent=0
    #allocation2 [shape = 'u8[114688]{0}', space=vmem, size = 0x1c000, scoped, tag = 'input window, operand 0, single buffered']
    #allocation3 [shape = 's32[1]{0}', space=sflag, size = 0x4, scoped, tag = 'scoped memory for tpu_custom_call.1']
    #allocation4 [shape = 's32[1]{0}', space=sflag, size = 0x4, scoped, tag = 'scoped memory for tpu_custom_call.1']
    #allocation5 [shape = 'u8[401408]{0}', space=vmem, size = 0x62000, scoped, tag = 'input window, operand 1, single buffered']
    #allocation6 [shape = 's32[1]{0}', space=sflag, size = 0x4, scoped, tag = 'scoped memory for tpu_custom_call.1']
    #allocation7 [shape = 'u8[65536]{0}', space=vmem, size = 0x10000, scoped, tag = 'input window, operand 3, single buffered']
    #allocation8 [shape = 'u8[65536]{0}', space=vmem, size = 0x10000, scoped, tag = 'input window, operand 5, single buffered']
    #allocation9 [shape = 's32[1]{0}', space=sflag, size = 0x4, scoped, tag = 'scoped memory for tpu_custom_call.1']
    #allocation10 [shape = 'u8[16384]{0}', space=vmem, size = 0x4000, scoped, tag = 'output window, operand 0, single buffered']
    %12 = vsyncpa [#allocation3], 0
    %13 = vsyncpa [#allocation6], 0
    %14 = vsyncpa [#allocation9], 0
    %15 = vsyncpa [#allocation4], 0
    // Predicated region
    $region2: #{tpu_custom_call.1} parent=1 // pred_check
      _
    $region3: #{tpu_custom_call.1} parent=1 // pred_check_branch
      %17 = sbr.rel (0) target = $region5
    $region4: #{tpu_custom_call.1} parent=1 // pred_region
      %s19 = ssub.s32 3584, 3584
      %20 = vsyncadd [#allocation3], %s19
      %s21 = sshll.u32 [#allocation2], 4
      %s22 = int_to_ptr.vmem [resolvable:$true] %s21
      %27 = dma.hbm_to_vmem [thread:$0]  %s0, 3584, %s22, [#allocation3], 896, 896, 56
    $region5: #{tpu_custom_call.1} parent=1 // pred_fallthru
      _
    // Predicated region
    $region6: #{tpu_custom_call.1} parent=1 // pred_check
      _
    $region7: #{tpu_custom_call.1} parent=1 // pred_check_branch
      %29 = sbr.rel (0) target = $region9
    $region8: #{tpu_custom_call.1} parent=1 // pred_region
      %s31 = ssub.s32 12544, 12544
      %32 = vsyncadd [#allocation6], %s31
      %s33 = sshll.u32 [#allocation5], 4
      %s34 = int_to_ptr.vmem [resolvable:$true] %s33
      %39 = dma.hbm_to_vmem [thread:$0]  %s1, 12544, %s34, [#allocation6], 128, 128, 8
    $region9: #{tpu_custom_call.1} parent=1 // pred_fallthru
      _
    // Predicated region
    $region10: #{tpu_custom_call.1} parent=1 // pred_check
      _
    $region11: #{tpu_custom_call.1} parent=1 // pred_check_branch
      %41 = sbr.rel (0) target = $region13
    $region12: #{tpu_custom_call.1} parent=1 // pred_region
      _
    $region13: #{tpu_custom_call.1} parent=1 // pred_fallthru
      _
    // Predicated region
    $region14: #{tpu_custom_call.1} parent=1 // pred_check
      _
    $region15: #{tpu_custom_call.1} parent=1 // pred_check_branch
      %43 = sbr.rel (0) target = $region17
    $region16: #{tpu_custom_call.1} parent=1 // pred_region
      %s45 = ssub.s32 2048, 2048
      %46 = vsyncadd [#allocation6], %s45
      %s47 = sshll.u32 [#allocation7], 4
      %s48 = int_to_ptr.vmem [resolvable:$true] %s47
      %53 = dma.hbm_to_vmem [thread:$0]  %s3, 2048, %s48, [#allocation6], 128, 128, 8
    $region17: #{tpu_custom_call.1} parent=1 // pred_fallthru
      _
    // Predicated region
    $region18: #{tpu_custom_call.1} parent=1 // pred_check
      _
    $region19: #{tpu_custom_call.1} parent=1 // pred_check_branch
      %55 = sbr.rel (0) target = $region21
    $region20: #{tpu_custom_call.1} parent=1 // pred_region
      _
    $region21: #{tpu_custom_call.1} parent=1 // pred_fallthru
      _
    // Predicated region
    $region22: #{tpu_custom_call.1} parent=1 // pred_check
      _
    $region23: #{tpu_custom_call.1} parent=1 // pred_check_branch
      %57 = sbr.rel (0) target = $region25
    $region24: #{tpu_custom_call.1} parent=1 // pred_region
      %s59 = ssub.s32 2048, 2048
      %60 = vsyncadd [#allocation9], %s59
      %s61 = sshll.u32 [#allocation8], 4
      %s62 = int_to_ptr.vmem [resolvable:$true] %s61
      %67 = dma.hbm_to_vmem [thread:$0]  %s5, 2048, %s62, [#allocation9], 128, 128, 8
    $region25: #{tpu_custom_call.1} parent=1 // pred_fallthru
      _
    // Predicated region
    $region26: #{tpu_custom_call.1} parent=1 // pred_check
      _
    $region27: #{tpu_custom_call.1} parent=1 // pred_check_branch
      %69 = sbr.rel (0) target = $region29
    $region28: #{tpu_custom_call.1} parent=1 // pred_region
      _
    $region29: #{tpu_custom_call.1} parent=1 // pred_fallthru
      _
    // Predicated region
    $region30: #{tpu_custom_call.1} parent=1 // pred_check
      _
    $region31: #{tpu_custom_call.1} parent=1 // pred_check_branch
      %71 = sbr.rel (0) target = $region33
    $region32: #{tpu_custom_call.1} parent=1 // pred_region
      %72 = dma.done [#allocation3], 3584
    $region33: #{tpu_custom_call.1} parent=1 // pred_fallthru
      _
    // Predicated region
    $region34: #{tpu_custom_call.1} parent=1 // pred_check
      _
    $region35: #{tpu_custom_call.1} parent=1 // pred_check_branch
      %74 = sbr.rel (0) target = $region37
    $region36: #{tpu_custom_call.1} parent=1 // pred_region
      %75 = dma.done [#allocation6], 12544
    $region37: #{tpu_custom_call.1} parent=1 // pred_fallthru
      _
    // Predicated region
    $region38: #{tpu_custom_call.1} parent=1 // pred_check
      _
    $region39: #{tpu_custom_call.1} parent=1 // pred_check_branch
      %77 = sbr.rel (0) target = $region41
    $region40: #{tpu_custom_call.1} parent=1 // pred_region
      %78 = dma.done [#allocation6], 2048
    $region41: #{tpu_custom_call.1} parent=1 // pred_fallthru
      _
    // Predicated region
    $region42: #{tpu_custom_call.1} parent=1 // pred_check
      _
    $region43: #{tpu_custom_call.1} parent=1 // pred_check_branch
      %80 = sbr.rel (0) target = $region45
    $region44: #{tpu_custom_call.1} parent=1 // pred_region
      %81 = dma.done [#allocation9], 2048
    $region45: #{tpu_custom_call.1} parent=1 // pred_fallthru
      _
    %v82 = vld [vmem:[#allocation2] sm:$0xff]
    %v83 = vld [vmem:[#allocation2 + $0x8] sm:$0xff]
    %v84 = vld [vmem:[#allocation2 + $0x10] sm:$0xff]
    %v85 = vld [vmem:[#allocation2 + $0x18] sm:$0xff]
    %v86 = vld [vmem:[#allocation2 + $0x20] sm:$0xff]
    %v87 = vld [vmem:[#allocation2 + $0x28] sm:$0xff]
    %v88 = vld [vmem:[#allocation2 + $0x30] sm:$0xff]
    %v89 = vld [vmem:[#allocation2 + $0x38] sm:$0xff]
    %v90 = vld [vmem:[#allocation2 + $0x40] sm:$0xff]
    %v91 = vld [vmem:[#allocation2 + $0x48] sm:$0xff]
    %v92 = vld [vmem:[#allocation2 + $0x50] sm:$0xff]
    %v93 = vld [vmem:[#allocation2 + $0x58] sm:$0xff]
    %v94 = vld [vmem:[#allocation2 + $0x60] sm:$0xff]
    %v95 = vld [vmem:[#allocation2 + $0x68] sm:$0xff]
    %v96 = vld [vmem:[#allocation2 + $0x70] sm:$0xff]
    %v97 = vld [vmem:[#allocation2 + $0x78] sm:$0xff]
    %v98 = vld [vmem:[#allocation2 + $0x80] sm:$0xff]
    %v99 = vld [vmem:[#allocation2 + $0x88] sm:$0xff]
    %v100 = vld [vmem:[#allocation2 + $0x90] sm:$0xff]
    %v101 = vld [vmem:[#allocation2 + $0x98] sm:$0xff]
    %v102 = vld [vmem:[#allocation2 + $0xa0] sm:$0xff]
    %v103 = vld [vmem:[#allocation2 + $0xa8] sm:$0xff]
    %v104 = vld [vmem:[#allocation2 + $0xb0] sm:$0xff]
    %v105 = vld [vmem:[#allocation2 + $0xb8] sm:$0xff]
    %v106 = vld [vmem:[#allocation2 + $0xc0] sm:$0xff]
    %v107 = vld [vmem:[#allocation2 + $0xc8] sm:$0xff]
    %v108 = vld [vmem:[#allocation2 + $0xd0] sm:$0xff]
    %v109 = vld [vmem:[#allocation2 + $0xd8] sm:$0xff]
    %v110 = vld [vmem:[#allocation5] sm:$0xff]
    %v111 = vld [vmem:[#allocation5 + $0x8] sm:$0xff]
    %v112 = vld [vmem:[#allocation5 + $0x10] sm:$0xff]
    %v113 = vld [vmem:[#allocation5 + $0x18] sm:$0xff]
    %v114 = vld [vmem:[#allocation5 + $0x20] sm:$0xff]
    %v115 = vld [vmem:[#allocation5 + $0x28] sm:$0xff]
    %v116 = vld [vmem:[#allocation5 + $0x30] sm:$0xff]
    %v117 = vld [vmem:[#allocation5 + $0x38] sm:$0xff]
    %v118 = vld [vmem:[#allocation5 + $0x40] sm:$0xff]
    %v119 = vld [vmem:[#allocation5 + $0x48] sm:$0xff]
    %v120 = vld [vmem:[#allocation5 + $0x50] sm:$0xff]
    %v121 = vld [vmem:[#allocation5 + $0x58] sm:$0xff]
    %v122 = vld [vmem:[#allocation5 + $0x60] sm:$0xff]
    %v123 = vld [vmem:[#allocation5 + $0x68] sm:$0xff]
    %v124 = vld [vmem:[#allocation5 + $0x70] sm:$0xff]
    %v125 = vld [vmem:[#allocation5 + $0x78] sm:$0xff]
    %v126 = vld [vmem:[#allocation5 + $0x80] sm:$0xff]
    %v127 = vld [vmem:[#allocation5 + $0x88] sm:$0xff]
    %v128 = vld [vmem:[#allocation5 + $0x90] sm:$0xff]
    %v129 = vld [vmem:[#allocation5 + $0x98] sm:$0xff]
    %v130 = vld [vmem:[#allocation5 + $0xa0] sm:$0xff]
    %v131 = vld [vmem:[#allocation5 + $0xa8] sm:$0xff]
    %v132 = vld [vmem:[#allocation5 + $0xb0] sm:$0xff]
    %v133 = vld [vmem:[#allocation5 + $0xb8] sm:$0xff]
    %v134 = vld [vmem:[#allocation5 + $0xc0] sm:$0xff]
    %v135 = vld [vmem:[#allocation5 + $0xc8] sm:$0xff]
    %v136 = vld [vmem:[#allocation5 + $0xd0] sm:$0xff]
    %v137 = vld [vmem:[#allocation5 + $0xd8] sm:$0xff]
    %v138 = vld [vmem:[#allocation5 + $0xe0] sm:$0xff]
    %v139 = vld [vmem:[#allocation5 + $0xe8] sm:$0xff]
    %v140 = vld [vmem:[#allocation5 + $0xf0] sm:$0xff]
    %v141 = vld [vmem:[#allocation5 + $0xf8] sm:$0xff]
    %v142 = vld [vmem:[#allocation5 + $0x100] sm:$0xff]
    %v143 = vld [vmem:[#allocation5 + $0x108] sm:$0xff]
    %v144 = vld [vmem:[#allocation5 + $0x110] sm:$0xff]
    %v145 = vld [vmem:[#allocation5 + $0x118] sm:$0xff]
    %v146 = vld [vmem:[#allocation5 + $0x120] sm:$0xff]
    %v147 = vld [vmem:[#allocation5 + $0x128] sm:$0xff]
    %v148 = vld [vmem:[#allocation5 + $0x130] sm:$0xff]
    %v149 = vld [vmem:[#allocation5 + $0x138] sm:$0xff]
    %v150 = vld [vmem:[#allocation5 + $0x140] sm:$0xff]
    %v151 = vld [vmem:[#allocation5 + $0x148] sm:$0xff]
    %v152 = vld [vmem:[#allocation5 + $0x150] sm:$0xff]
    %v153 = vld [vmem:[#allocation5 + $0x158] sm:$0xff]
    %v154 = vld [vmem:[#allocation5 + $0x160] sm:$0xff]
    %v155 = vld [vmem:[#allocation5 + $0x168] sm:$0xff]
    %v156 = vld [vmem:[#allocation5 + $0x170] sm:$0xff]
    %v157 = vld [vmem:[#allocation5 + $0x178] sm:$0xff]
    %v158 = vld [vmem:[#allocation5 + $0x180] sm:$0xff]
    %v159 = vld [vmem:[#allocation5 + $0x188] sm:$0xff]
    %v160 = vld [vmem:[#allocation5 + $0x190] sm:$0xff]
    %v161 = vld [vmem:[#allocation5 + $0x198] sm:$0xff]
    %v162 = vld [vmem:[#allocation5 + $0x1a0] sm:$0xff]
    %v163 = vld [vmem:[#allocation5 + $0x1a8] sm:$0xff]
    %v164 = vld [vmem:[#allocation5 + $0x1b0] sm:$0xff]
    %v165 = vld [vmem:[#allocation5 + $0x1b8] sm:$0xff]
    %v166 = vld [vmem:[#allocation5 + $0x1c0] sm:$0xff]
    %v167 = vld [vmem:[#allocation5 + $0x1c8] sm:$0xff]
    %v168 = vld [vmem:[#allocation5 + $0x1d0] sm:$0xff]
    %v169 = vld [vmem:[#allocation5 + $0x1d8] sm:$0xff]
    %v170 = vld [vmem:[#allocation5 + $0x1e0] sm:$0xff]
    %v171 = vld [vmem:[#allocation5 + $0x1e8] sm:$0xff]
    %v172 = vld [vmem:[#allocation5 + $0x1f0] sm:$0xff]
    %v173 = vld [vmem:[#allocation5 + $0x1f8] sm:$0xff]
    %v174 = vld [vmem:[#allocation5 + $0x200] sm:$0xff]
    %v175 = vld [vmem:[#allocation5 + $0x208] sm:$0xff]
    %v176 = vld [vmem:[#allocation5 + $0x210] sm:$0xff]
    %v177 = vld [vmem:[#allocation5 + $0x218] sm:$0xff]
    %v178 = vld [vmem:[#allocation5 + $0x220] sm:$0xff]
    %v179 = vld [vmem:[#allocation5 + $0x228] sm:$0xff]
    %v180 = vld [vmem:[#allocation5 + $0x230] sm:$0xff]
    %v181 = vld [vmem:[#allocation5 + $0x238] sm:$0xff]
    %v182 = vld [vmem:[#allocation5 + $0x240] sm:$0xff]
    %v183 = vld [vmem:[#allocation5 + $0x248] sm:$0xff]
    %v184 = vld [vmem:[#allocation5 + $0x250] sm:$0xff]
    %v185 = vld [vmem:[#allocation5 + $0x258] sm:$0xff]
    %v186 = vld [vmem:[#allocation5 + $0x260] sm:$0xff]
    %v187 = vld [vmem:[#allocation5 + $0x268] sm:$0xff]
    %v188 = vld [vmem:[#allocation5 + $0x270] sm:$0xff]
    %v189 = vld [vmem:[#allocation5 + $0x278] sm:$0xff]
    %v190 = vld [vmem:[#allocation5 + $0x280] sm:$0xff]
    %v191 = vld [vmem:[#allocation5 + $0x288] sm:$0xff]
    %v192 = vld [vmem:[#allocation5 + $0x290] sm:$0xff]
    %v193 = vld [vmem:[#allocation5 + $0x298] sm:$0xff]
    %v194 = vld [vmem:[#allocation5 + $0x2a0] sm:$0xff]
    %v195 = vld [vmem:[#allocation5 + $0x2a8] sm:$0xff]
    %v196 = vld [vmem:[#allocation5 + $0x2b0] sm:$0xff]
    %v197 = vld [vmem:[#allocation5 + $0x2b8] sm:$0xff]
    %v198 = vld [vmem:[#allocation5 + $0x2c0] sm:$0xff]
    %v199 = vld [vmem:[#allocation5 + $0x2c8] sm:$0xff]
    %v200 = vld [vmem:[#allocation5 + $0x2d0] sm:$0xff]
    %v201 = vld [vmem:[#allocation5 + $0x2d8] sm:$0xff]
    %v202 = vld [vmem:[#allocation5 + $0x2e0] sm:$0xff]
    %v203 = vld [vmem:[#allocation5 + $0x2e8] sm:$0xff]
    %v204 = vld [vmem:[#allocation5 + $0x2f0] sm:$0xff]
    %v205 = vld [vmem:[#allocation5 + $0x2f8] sm:$0xff]
    %v206 = vld [vmem:[#allocation5 + $0x300] sm:$0xff]
    %v207 = vld [vmem:[#allocation5 + $0x308] sm:$0xff]
    %v208 = vld [vmem:[%s2] sm:$0x1]
    %v209 = vld [vmem:[#allocation7] sm:$0xff]
    %v210 = vld [vmem:[#allocation7 + $0x8] sm:$0xff]
    %v211 = vld [vmem:[#allocation7 + $0x10] sm:$0xff]
    %v212 = vld [vmem:[#allocation7 + $0x18] sm:$0xff]
    %v213 = vld [vmem:[#allocation7 + $0x20] sm:$0xff]
    %v214 = vld [vmem:[#allocation7 + $0x28] sm:$0xff]
    %v215 = vld [vmem:[#allocation7 + $0x30] sm:$0xff]
    %v216 = vld [vmem:[#allocation7 + $0x38] sm:$0xff]
    %v217 = vld [vmem:[#allocation7 + $0x40] sm:$0xff]
    %v218 = vld [vmem:[#allocation7 + $0x48] sm:$0xff]
    %v219 = vld [vmem:[#allocation7 + $0x50] sm:$0xff]
    %v220 = vld [vmem:[#allocation7 + $0x58] sm:$0xff]
    %v221 = vld [vmem:[#allocation7 + $0x60] sm:$0xff]
    %v222 = vld [vmem:[#allocation7 + $0x68] sm:$0xff]
    %v223 = vld [vmem:[#allocation7 + $0x70] sm:$0xff]
    %v224 = vld [vmem:[#allocation7 + $0x78] sm:$0xff]
    %v225 = vld [vmem:[%s4] sm:$0x1]
    %v226 = vld [vmem:[#allocation8] sm:$0xff]
    %v227 = vld [vmem:[#allocation8 + $0x8] sm:$0xff]
    %v228 = vld [vmem:[#allocation8 + $0x10] sm:$0xff]
    %v229 = vld [vmem:[#allocation8 + $0x18] sm:$0xff]
    %v230 = vld [vmem:[#allocation8 + $0x20] sm:$0xff]
    %v231 = vld [vmem:[#allocation8 + $0x28] sm:$0xff]
    %v232 = vld [vmem:[#allocation8 + $0x30] sm:$0xff]
    %v233 = vld [vmem:[#allocation8 + $0x38] sm:$0xff]
    %v234 = vld [vmem:[#allocation8 + $0x40] sm:$0xff]
    %v235 = vld [vmem:[#allocation8 + $0x48] sm:$0xff]
    %v236 = vld [vmem:[#allocation8 + $0x50] sm:$0xff]
    %v237 = vld [vmem:[#allocation8 + $0x58] sm:$0xff]
    %v238 = vld [vmem:[#allocation8 + $0x60] sm:$0xff]
    %v239 = vld [vmem:[#allocation8 + $0x68] sm:$0xff]
    %v240 = vld [vmem:[#allocation8 + $0x70] sm:$0xff]
    %v241 = vld [vmem:[#allocation8 + $0x78] sm:$0xff]
    %v242 = vld [vmem:[%s6] sm:$0x1]
    %v244 = vlaneseq
    %v245 = vshrl.u32 %v244, 7
    %v246 = vsub.s32 0, %v245
    %v247 = vrot.slane %v208, %v246
    %vm249 = vcmask 130048
    %v251 = vsel %vm249, %v88, 0
    %v254 = vsel %vm249, %v95, 0
    %v257 = vsel %vm249, %v102, 0
    %v260 = vsel %vm249, %v109, 0
    %262 = vmatprep.subr.mxu0 0.0
    %263 = vmatpush1.msra.mxu0 %v125
    %264 = vmatprep.subr.mxu0 0.0
    %265 = vmatpush1.msra.mxu0 %v124
    %266 = vmatprep.subr.mxu0 0.0
    %267 = vmatpush1.msra.mxu0 %v123
    %268 = vmatprep.subr.mxu0 0.0
    %269 = vmatpush1.msra.mxu0 %v122
    %270 = vmatprep.subr.mxu0 0.0
    %271 = vmatpush1.msra.mxu0 %v121
    %272 = vmatprep.subr.mxu0 0.0
    %273 = vmatpush1.msra.mxu0 %v120
    %274 = vmatprep.subr.mxu0 0.0
    %275 = vmatpush1.msra.mxu0 %v119
    %276 = vmatprep.subr.mxu0 0.0
    %277 = vmatpush1.msra.mxu0 %v118
    %278 = vmatprep.subr.mxu0 0.0
    %279 = vmatpush1.msra.mxu0 %v117
    %280 = vmatprep.subr.mxu0 0.0
    %281 = vmatpush1.msra.mxu0 %v116
    %282 = vmatprep.subr.mxu0 0.0
    %283 = vmatpush1.msra.mxu0 %v115
    %284 = vmatprep.subr.mxu0 0.0
    %285 = vmatpush1.msra.mxu0 %v114
    %286 = vmatprep.subr.mxu0 0.0
    %287 = vmatpush1.msra.mxu0 %v113
    %288 = vmatprep.subr.mxu0 0.0
    %289 = vmatpush1.msra.mxu0 %v112
    %290 = vmatprep.subr.mxu0 0.0
    %291 = vmatpush1.msra.mxu0 %v111
    %292 = vmatprep.subr.mxu0 0.0
    %293 = vmatpush1.msra.mxu0 %v110
    %294 = vmatprep.subr.mxu0 0.0
    %295 = vmatpush2.msra.mxu0 %v141
    %296 = vmatprep.subr.mxu0 0.0
    %297 = vmatpush2.msra.mxu0 %v140
    %298 = vmatprep.subr.mxu0 0.0
    %299 = vmatpush2.msra.mxu0 %v139
    %300 = vmatprep.subr.mxu0 0.0
    %301 = vmatpush2.msra.mxu0 %v138
    %302 = vmatprep.subr.mxu0 0.0
    %303 = vmatpush2.msra.mxu0 %v137
    %304 = vmatprep.subr.mxu0 0.0
    %305 = vmatpush2.msra.mxu0 %v136
    %306 = vmatprep.subr.mxu0 0.0
    %307 = vmatpush2.msra.mxu0 %v135
    %308 = vmatprep.subr.mxu0 0.0
    %309 = vmatpush2.msra.mxu0 %v134
    %310 = vmatprep.subr.mxu0 0.0
    %311 = vmatpush2.msra.mxu0 %v133
    %312 = vmatprep.subr.mxu0 0.0
    %313 = vmatpush2.msra.mxu0 %v132
    %314 = vmatprep.subr.mxu0 0.0
    %315 = vmatpush2.msra.mxu0 %v131
    %316 = vmatprep.subr.mxu0 0.0
    %317 = vmatpush2.msra.mxu0 %v130
    %318 = vmatprep.subr.mxu0 0.0
    %319 = vmatpush2.msra.mxu0 %v129
    %320 = vmatprep.subr.mxu0 0.0
    %321 = vmatpush2.msra.mxu0 %v128
    %322 = vmatprep.subr.mxu0 0.0
    %323 = vmatpush2.msra.mxu0 %v127
    %324 = vmatprep.subr.mxu0 0.0
    %325 = vmatpush2.msra.mxu0 %v126
    %326 = vmatprep.mubr.f32.mxu0 %v83
    %327 = vmatmul.mubr.f32.gmra.mxu0 %v82
    %v328 = vpop.f32.mrf.mxu0
    %v329 = vadd.f32 %v247, %v328
    %v330 = vpop.f32.mrf.mxu0
    %331 = vmatprep.mubr.f32.mxu0 %v90
    %332 = vmatmul.mubr.f32.gmra.mxu0 %v89
    %v333 = vpop.f32.mrf.mxu0
    %v334 = vadd.f32 %v247, %v333
    %v335 = vpop.f32.mrf.mxu0
    %336 = vmatprep.mubr.f32.mxu0 %v97
    %337 = vmatmul.mubr.f32.gmra.mxu0 %v96
    %v338 = vpop.f32.mrf.mxu0
    %v339 = vadd.f32 %v247, %v338
    %v340 = vpop.f32.mrf.mxu0
    %341 = vmatprep.mubr.f32.mxu0 %v104
    %342 = vmatmul.mubr.f32.gmra.mxu0 %v103
    %v343 = vpop.f32.mrf.mxu0
    %v344 = vadd.f32 %v247, %v343
    %v345 = vpop.f32.mrf.mxu0
    %346 = vdwg.mxu0
    %347 = vmatprep.subr.mxu0 0.0
    %348 = vmatpush1.msra.mxu0 %v157
    %349 = vmatprep.subr.mxu0 0.0
    %350 = vmatpush1.msra.mxu0 %v156
    %351 = vmatprep.subr.mxu0 0.0
    %352 = vmatpush1.msra.mxu0 %v155
    %353 = vmatprep.subr.mxu0 0.0
    %354 = vmatpush1.msra.mxu0 %v154
    %355 = vmatprep.subr.mxu0 0.0
    %356 = vmatpush1.msra.mxu0 %v153
    %357 = vmatprep.subr.mxu0 0.0
    %358 = vmatpush1.msra.mxu0 %v152
    %359 = vmatprep.subr.mxu0 0.0
    %360 = vmatpush1.msra.mxu0 %v151
    %361 = vmatprep.subr.mxu0 0.0
    %362 = vmatpush1.msra.mxu0 %v150
    %363 = vmatprep.subr.mxu0 0.0
    %364 = vmatpush1.msra.mxu0 %v149
    %365 = vmatprep.subr.mxu0 0.0
    %366 = vmatpush1.msra.mxu0 %v148
    %367 = vmatprep.subr.mxu0 0.0
    %368 = vmatpush1.msra.mxu0 %v147
    %369 = vmatprep.subr.mxu0 0.0
    %370 = vmatpush1.msra.mxu0 %v146
    %371 = vmatprep.subr.mxu0 0.0
    %372 = vmatpush1.msra.mxu0 %v145
    %373 = vmatprep.subr.mxu0 0.0
    %374 = vmatpush1.msra.mxu0 %v144
    %375 = vmatprep.subr.mxu0 0.0
    %376 = vmatpush1.msra.mxu0 %v143
    %377 = vmatprep.subr.mxu0 0.0
    %378 = vmatpush1.msra.mxu0 %v142
    %379 = vmatprep.subr.mxu0 0.0
    %380 = vmatpush2.msra.mxu0 %v173
    %381 = vmatprep.subr.mxu0 0.0
    %382 = vmatpush2.msra.mxu0 %v172
    %383 = vmatprep.subr.mxu0 0.0
    %384 = vmatpush2.msra.mxu0 %v171
    %385 = vmatprep.subr.mxu0 0.0
    %386 = vmatpush2.msra.mxu0 %v170
    %387 = vmatprep.subr.mxu0 0.0
    %388 = vmatpush2.msra.mxu0 %v169
    %389 = vmatprep.subr.mxu0 0.0
    %390 = vmatpush2.msra.mxu0 %v168
    %391 = vmatprep.subr.mxu0 0.0
    %392 = vmatpush2.msra.mxu0 %v167
    %393 = vmatprep.subr.mxu0 0.0
    %394 = vmatpush2.msra.mxu0 %v166
    %395 = vmatprep.subr.mxu0 0.0
    %396 = vmatpush2.msra.mxu0 %v165
    %397 = vmatprep.subr.mxu0 0.0
    %398 = vmatpush2.msra.mxu0 %v164
    %399 = vmatprep.subr.mxu0 0.0
    %400 = vmatpush2.msra.mxu0 %v163
    %401 = vmatprep.subr.mxu0 0.0
    %402 = vmatpush2.msra.mxu0 %v162
    %403 = vmatprep.subr.mxu0 0.0
    %404 = vmatpush2.msra.mxu0 %v161
    %405 = vmatprep.subr.mxu0 0.0
    %406 = vmatpush2.msra.mxu0 %v160
    %407 = vmatprep.subr.mxu0 0.0
    %408 = vmatpush2.msra.mxu0 %v159
    %409 = vmatprep.subr.mxu0 0.0
    %410 = vmatpush2.msra.mxu0 %v158
    %411 = vmatprep.mubr.f32.mxu0 %v85
    %412 = vmatmul.mubr.f32.gmra.mxu0 %v84
    %v413 = vpop.f32.mrf.mxu0
    %v414 = vadd.f32 %v329, %v413
    %v415 = vpop.f32.mrf.mxu0
    %416 = vmatprep.mubr.f32.mxu0 %v92
    %417 = vmatmul.mubr.f32.gmra.mxu0 %v91
    %v418 = vpop.f32.mrf.mxu0
    %v419 = vadd.f32 %v334, %v418
    %v420 = vpop.f32.mrf.mxu0
    %421 = vmatprep.mubr.f32.mxu0 %v99
    %422 = vmatmul.mubr.f32.gmra.mxu0 %v98
    %v423 = vpop.f32.mrf.mxu0
    %v424 = vadd.f32 %v339, %v423
    %v425 = vpop.f32.mrf.mxu0
    %426 = vmatprep.mubr.f32.mxu0 %v106
    %427 = vmatmul.mubr.f32.gmra.mxu0 %v105
    %v428 = vpop.f32.mrf.mxu0
    %v429 = vadd.f32 %v344, %v428
    %v430 = vpop.f32.mrf.mxu0
    %431 = vdwg.mxu0
    %432 = vmatprep.subr.mxu0 0.0
    %433 = vmatpush1.msra.mxu0 %v189
    %434 = vmatprep.subr.mxu0 0.0
    %435 = vmatpush1.msra.mxu0 %v188
    %436 = vmatprep.subr.mxu0 0.0
    %437 = vmatpush1.msra.mxu0 %v187
    %438 = vmatprep.subr.mxu0 0.0
    %439 = vmatpush1.msra.mxu0 %v186
    %440 = vmatprep.subr.mxu0 0.0
    %441 = vmatpush1.msra.mxu0 %v185
    %442 = vmatprep.subr.mxu0 0.0
    %443 = vmatpush1.msra.mxu0 %v184
    %444 = vmatprep.subr.mxu0 0.0
    %445 = vmatpush1.msra.mxu0 %v183
    %446 = vmatprep.subr.mxu0 0.0
    %447 = vmatpush1.msra.mxu0 %v182
    %448 = vmatprep.subr.mxu0 0.0
    %449 = vmatpush1.msra.mxu0 %v181
    %450 = vmatprep.subr.mxu0 0.0
    %451 = vmatpush1.msra.mxu0 %v180
    %452 = vmatprep.subr.mxu0 0.0
    %453 = vmatpush1.msra.mxu0 %v179
    %454 = vmatprep.subr.mxu0 0.0
    %455 = vmatpush1.msra.mxu0 %v178
    %456 = vmatprep.subr.mxu0 0.0
    %457 = vmatpush1.msra.mxu0 %v177
    %458 = vmatprep.subr.mxu0 0.0
    %459 = vmatpush1.msra.mxu0 %v176
    %460 = vmatprep.subr.mxu0 0.0
    %461 = vmatpush1.msra.mxu0 %v175
    %462 = vmatprep.subr.mxu0 0.0
    %463 = vmatpush1.msra.mxu0 %v174
    %464 = vmatprep.subr.mxu0 0.0
    %465 = vmatpush2.msra.mxu0 %v205
    %466 = vmatprep.subr.mxu0 0.0
    %467 = vmatpush2.msra.mxu0 %v204
    %468 = vmatprep.subr.mxu0 0.0
    %469 = vmatpush2.msra.mxu0 %v203
    %470 = vmatprep.subr.mxu0 0.0
    %471 = vmatpush2.msra.mxu0 %v202
    %472 = vmatprep.subr.mxu0 0.0
    %473 = vmatpush2.msra.mxu0 %v201
    %474 = vmatprep.subr.mxu0 0.0
    %475 = vmatpush2.msra.mxu0 %v200
    %476 = vmatprep.subr.mxu0 0.0
    %477 = vmatpush2.msra.mxu0 %v199
    %478 = vmatprep.subr.mxu0 0.0
    %479 = vmatpush2.msra.mxu0 %v198
    %480 = vmatprep.subr.mxu0 0.0
    %481 = vmatpush2.msra.mxu0 %v197
    %482 = vmatprep.subr.mxu0 0.0
    %483 = vmatpush2.msra.mxu0 %v196
    %484 = vmatprep.subr.mxu0 0.0
    %485 = vmatpush2.msra.mxu0 %v195
    %486 = vmatprep.subr.mxu0 0.0
    %487 = vmatpush2.msra.mxu0 %v194
    %488 = vmatprep.subr.mxu0 0.0
    %489 = vmatpush2.msra.mxu0 %v193
    %490 = vmatprep.subr.mxu0 0.0
    %491 = vmatpush2.msra.mxu0 %v192
    %492 = vmatprep.subr.mxu0 0.0
    %493 = vmatpush2.msra.mxu0 %v191
    %494 = vmatprep.subr.mxu0 0.0
    %495 = vmatpush2.msra.mxu0 %v190
    %496 = vmatprep.mubr.f32.mxu0 %v87
    %497 = vmatmul.mubr.f32.gmra.mxu0 %v86
    %v498 = vpop.f32.mrf.mxu0
    %v499 = vadd.f32 %v414, %v498
    %v500 = vpop.f32.mrf.mxu0
    %501 = vmatprep.mubr.f32.mxu0 %v94
    %502 = vmatmul.mubr.f32.gmra.mxu0 %v93
    %v503 = vpop.f32.mrf.mxu0
    %v504 = vadd.f32 %v419, %v503
    %v505 = vpop.f32.mrf.mxu0
    %506 = vmatprep.mubr.f32.mxu0 %v101
    %507 = vmatmul.mubr.f32.gmra.mxu0 %v100
    %v508 = vpop.f32.mrf.mxu0
    %v509 = vadd.f32 %v424, %v508
    %v510 = vpop.f32.mrf.mxu0
    %511 = vmatprep.mubr.f32.mxu0 %v108
    %512 = vmatmul.mubr.f32.gmra.mxu0 %v107
    %v513 = vpop.f32.mrf.mxu0
    %v514 = vadd.f32 %v429, %v513
    %v515 = vpop.f32.mrf.mxu0
    %516 = vdwg.mxu0
    %517 = vmatprep.subr.mxu0 0.0
    %518 = vmatpush1.msra.mxu0 0.0
    %519 = vmatprep.subr.mxu0 0.0
    %520 = vmatpush1.msra.mxu0 0.0
    %521 = vmatprep.subr.mxu0 0.0
    %522 = vmatpush1.msra.mxu0 0.0
    %523 = vmatprep.subr.mxu0 0.0
    %524 = vmatpush1.msra.mxu0 0.0
    %525 = vmatprep.subr.mxu0 0.0
    %526 = vmatpush1.msra.mxu0 0.0
    %527 = vmatprep.subr.mxu0 0.0
    %528 = vmatpush1.msra.mxu0 0.0
    %529 = vmatprep.subr.mxu0 0.0
    %530 = vmatpush1.msra.mxu0 0.0
    %531 = vmatprep.subr.mxu0 0.0
    %532 = vmatpush1.msra.mxu0 0.0
    %533 = vmatprep.subr.mxu0 0.0
    %534 = vmatpush1.msra.mxu0 0.0
    %535 = vmatprep.subr.mxu0 0.0
    %536 = vmatpush1.msra.mxu0 0.0
    %537 = vmatprep.subr.mxu0 0.0
    %538 = vmatpush1.msra.mxu0 0.0
    %539 = vmatprep.subr.mxu0 0.0
    %540 = vmatpush1.msra.mxu0 0.0
    %541 = vmatprep.subr.mxu0 0.0
    %542 = vmatpush1.msra.mxu0 0.0
    %543 = vmatprep.subr.mxu0 0.0
    %544 = vmatpush1.msra.mxu0 0.0
    %545 = vmatprep.subr.mxu0 0.0
    %546 = vmatpush1.msra.mxu0 %v207
    %547 = vmatprep.subr.mxu0 0.0
    %548 = vmatpush1.msra.mxu0 %v206
    %549 = vmatprep.subr.mxu0 0.0
    %550 = vmatpush2.msra.mxu0 0.0
    %551 = vmatprep.subr.mxu0 0.0
    %552 = vmatpush2.msra.mxu0 0.0
    %553 = vmatprep.subr.mxu0 0.0
    %554 = vmatpush2.msra.mxu0 0.0
    %555 = vmatprep.subr.mxu0 0.0
    %556 = vmatpush2.msra.mxu0 0.0
    %557 = vmatprep.subr.mxu0 0.0
    %558 = vmatpush2.msra.mxu0 0.0
    %559 = vmatprep.subr.mxu0 0.0
    %560 = vmatpush2.msra.mxu0 0.0
    %561 = vmatprep.subr.mxu0 0.0
    %562 = vmatpush2.msra.mxu0 0.0
    %563 = vmatprep.subr.mxu0 0.0
    %564 = vmatpush2.msra.mxu0 0.0
    %565 = vmatprep.subr.mxu0 0.0
    %566 = vmatpush2.msra.mxu0 0.0
    %567 = vmatprep.subr.mxu0 0.0
    %568 = vmatpush2.msra.mxu0 0.0
    %569 = vmatprep.subr.mxu0 0.0
    %570 = vmatpush2.msra.mxu0 0.0
    %571 = vmatprep.subr.mxu0 0.0
    %572 = vmatpush2.msra.mxu0 0.0
    %573 = vmatprep.subr.mxu0 0.0
    %574 = vmatpush2.msra.mxu0 0.0
    %575 = vmatprep.subr.mxu0 0.0
    %576 = vmatpush2.msra.mxu0 0.0
    %577 = vmatprep.subr.mxu0 0.0
    %578 = vmatpush2.msra.mxu0 0.0
    %579 = vmatprep.subr.mxu0 0.0
    %580 = vmatpush2.msra.mxu0 0.0
    %581 = vmatprep.mubr.f32.mxu0 0.0
    %582 = vmatmul.mubr.f32.gmra.mxu0 %v251
    %v583 = vpop.f32.mrf.mxu0
    %v584 = vadd.f32 %v499, %v583
    %v585 = vpop.f32.mrf.mxu0
    %586 = vmatprep.mubr.f32.mxu0 0.0
    %587 = vmatmul.mubr.f32.gmra.mxu0 %v254
    %v588 = vpop.f32.mrf.mxu0
    %v589 = vadd.f32 %v504, %v588
    %v590 = vpop.f32.mrf.mxu0
    %591 = vmatprep.mubr.f32.mxu0 0.0
    %592 = vmatmul.mubr.f32.gmra.mxu0 %v257
    %v593 = vpop.f32.mrf.mxu0
    %v594 = vadd.f32 %v509, %v593
    %v595 = vpop.f32.mrf.mxu0
    %596 = vmatprep.mubr.f32.mxu0 0.0
    %597 = vmatmul.mubr.f32.gmra.mxu0 %v260
    %v598 = vpop.f32.mrf.mxu0
    %v599 = vadd.f32 %v514, %v598
    %v600 = vpop.f32.mrf.mxu0
    %601 = vdwg.mxu0
    %v602 = vadd.f32 %v584, %v589
    %v603 = vadd.f32 %v602, %v594
    %v604 = vadd.f32 %v603, %v599
    %v605 = vrot.slane %v604, 4
    %v606 = vadd.f32 %v604, %v605
    %v607 = vrot.slane %v606, 2
    %v608 = vadd.f32 %v606, %v607
    %v609 = vrot.slane %v608, 1
    %v610 = vadd.f32 %v608, %v609
    %v611 = vmul.f32 %v584, %v584
    %v612 = vmul.f32 %v589, %v589
    %v613 = vmul.f32 %v594, %v594
    %v614 = vmul.f32 %v599, %v599
    %v615 = vadd.f32 %v611, %v612
    %v616 = vadd.f32 %v615, %v613
    %v617 = vadd.f32 %v616, %v614
    %v618 = vrot.slane %v617, 4
    %v619 = vadd.f32 %v617, %v618
    %v620 = vrot.slane %v619, 2
    %v621 = vadd.f32 %v619, %v620
    %v622 = vrot.slane %v621, 1
    %v623 = vadd.f32 %v621, %v622
    %v624 = vmul.f32 %v610, 0.03125
    %v625 = vmul.f32 %v624, %v624
    %v626 = vmul.f32 %v625, 32.0
    %v627 = vsub.f32 %v623, %v626
    %v628 = vmul.f32 %v627, 0.032258064
    %v629 = vadd.f32 %v628, 1e-05
    %v630 = vrsqrt.pop %v629
    %v631 = vsub.f32 %v584, %v624
    %v632 = vsub.f32 %v589, %v624
    %v633 = vsub.f32 %v594, %v624
    %v634 = vsub.f32 %v599, %v624
    %v635 = vmul.f32 %v631, %v630
    %v636 = vmul.f32 %v632, %v630
    %v637 = vmul.f32 %v633, %v630
    %v638 = vmul.f32 %v634, %v630
    %v639 = vmax.f32 %v635, 0.0
    %v640 = vmax.f32 %v636, 0.0
    %v641 = vmax.f32 %v637, 0.0
    %v642 = vmax.f32 %v638, 0.0
    %v644 = vlaneseq
    %v645 = vshrl.u32 %v644, 7
    %v646 = vsub.s32 0, %v645
    %v647 = vrot.slane %v225, %v646
    %649 = vmatprep.subr.mxu0 0.0
    %650 = vmatpush1.msra.mxu0 %v224
    %651 = vmatprep.subr.mxu0 0.0
    %652 = vmatpush1.msra.mxu0 %v223
    %653 = vmatprep.subr.mxu0 0.0
    %654 = vmatpush1.msra.mxu0 %v222
    %655 = vmatprep.subr.mxu0 0.0
    %656 = vmatpush1.msra.mxu0 %v221
    %657 = vmatprep.subr.mxu0 0.0
    %658 = vmatpush1.msra.mxu0 %v220
    %659 = vmatprep.subr.mxu0 0.0
    %660 = vmatpush1.msra.mxu0 %v219
    %661 = vmatprep.subr.mxu0 0.0
    %662 = vmatpush1.msra.mxu0 %v218
    %663 = vmatprep.subr.mxu0 0.0
    %664 = vmatpush1.msra.mxu0 %v217
    %665 = vmatprep.subr.mxu0 0.0
    %666 = vmatpush1.msra.mxu0 %v216
    %667 = vmatprep.subr.mxu0 0.0
    %668 = vmatpush1.msra.mxu0 %v215
    %669 = vmatprep.subr.mxu0 0.0
    %670 = vmatpush1.msra.mxu0 %v214
    %671 = vmatprep.subr.mxu0 0.0
    %672 = vmatpush1.msra.mxu0 %v213
    %673 = vmatprep.subr.mxu0 0.0
    %674 = vmatpush1.msra.mxu0 %v212
    %675 = vmatprep.subr.mxu0 0.0
    %676 = vmatpush1.msra.mxu0 %v211
    %677 = vmatprep.subr.mxu0 0.0
    %678 = vmatpush1.msra.mxu0 %v210
    %679 = vmatprep.subr.mxu0 0.0
    %680 = vmatpush1.msra.mxu0 %v209
    %681 = vmatprep.subr.mxu0 0.0
    %682 = vmatpush2.msra.mxu0 0.0
    %683 = vmatprep.subr.mxu0 0.0
    %684 = vmatpush2.msra.mxu0 0.0
    %685 = vmatprep.subr.mxu0 0.0
    %686 = vmatpush2.msra.mxu0 0.0
    %687 = vmatprep.subr.mxu0 0.0
    %688 = vmatpush2.msra.mxu0 0.0
    %689 = vmatprep.subr.mxu0 0.0
    %690 = vmatpush2.msra.mxu0 0.0
    %691 = vmatprep.subr.mxu0 0.0
    %692 = vmatpush2.msra.mxu0 0.0
    %693 = vmatprep.subr.mxu0 0.0
    %694 = vmatpush2.msra.mxu0 0.0
    %695 = vmatprep.subr.mxu0 0.0
    %696 = vmatpush2.msra.mxu0 0.0
    %697 = vmatprep.subr.mxu0 0.0
    %698 = vmatpush2.msra.mxu0 0.0
    %699 = vmatprep.subr.mxu0 0.0
    %700 = vmatpush2.msra.mxu0 0.0
    %701 = vmatprep.subr.mxu0 0.0
    %702 = vmatpush2.msra.mxu0 0.0
    %703 = vmatprep.subr.mxu0 0.0
    %704 = vmatpush2.msra.mxu0 0.0
    %705 = vmatprep.subr.mxu0 0.0
    %706 = vmatpush2.msra.mxu0 0.0
    %707 = vmatprep.subr.mxu0 0.0
    %708 = vmatpush2.msra.mxu0 0.0
    %709 = vmatprep.subr.mxu0 0.0
    %710 = vmatpush2.msra.mxu0 0.0
    %711 = vmatprep.subr.mxu0 0.0
    %712 = vmatpush2.msra.mxu0 0.0
    %713 = vmatprep.mubr.f32.mxu0 0.0
    %714 = vmatmul.mubr.f32.gmra.mxu0 %v639
    %v715 = vpop.f32.mrf.mxu0
    %v716 = vadd.f32 %v647, %v715
    %v717 = vpop.f32.mrf.mxu0
    %718 = vmatprep.mubr.f32.mxu0 0.0
    %719 = vmatmul.mubr.f32.gmra.mxu0 %v640
    %v720 = vpop.f32.mrf.mxu0
    %v721 = vadd.f32 %v647, %v720
    %v722 = vpop.f32.mrf.mxu0
    %723 = vmatprep.mubr.f32.mxu0 0.0
    %724 = vmatmul.mubr.f32.gmra.mxu0 %v641
    %v725 = vpop.f32.mrf.mxu0
    %v726 = vadd.f32 %v647, %v725
    %v727 = vpop.f32.mrf.mxu0
    %728 = vmatprep.mubr.f32.mxu0 0.0
    %729 = vmatmul.mubr.f32.gmra.mxu0 %v642
    %v730 = vpop.f32.mrf.mxu0
    %v731 = vadd.f32 %v647, %v730
    %v732 = vpop.f32.mrf.mxu0
    %733 = vdwg.mxu0
    %v734 = vadd.f32 %v716, %v721
    %v735 = vadd.f32 %v734, %v726
    %v736 = vadd.f32 %v735, %v731
    %v737 = vrot.slane %v736, 4
    %v738 = vadd.f32 %v736, %v737
    %v739 = vrot.slane %v738, 2
    %v740 = vadd.f32 %v738, %v739
    %v741 = vrot.slane %v740, 1
    %v742 = vadd.f32 %v740, %v741
    %v743 = vmul.f32 %v716, %v716
    %v744 = vmul.f32 %v721, %v721
    %v745 = vmul.f32 %v726, %v726
    %v746 = vmul.f32 %v731, %v731
    %v747 = vadd.f32 %v743, %v744
    %v748 = vadd.f32 %v747, %v745
    %v749 = vadd.f32 %v748, %v746
    %v750 = vrot.slane %v749, 4
    %v751 = vadd.f32 %v749, %v750
    %v752 = vrot.slane %v751, 2
    %v753 = vadd.f32 %v751, %v752
    %v754 = vrot.slane %v753, 1
    %v755 = vadd.f32 %v753, %v754
    %v756 = vmul.f32 %v742, 0.03125
    %v757 = vmul.f32 %v756, %v756
    %v758 = vmul.f32 %v757, 32.0
    %v759 = vsub.f32 %v755, %v758
    %v760 = vmul.f32 %v759, 0.032258064
    %v761 = vadd.f32 %v760, 1e-05
    %v762 = vrsqrt.pop %v761
    %v763 = vsub.f32 %v716, %v756
    %v764 = vsub.f32 %v721, %v756
    %v765 = vsub.f32 %v726, %v756
    %v766 = vsub.f32 %v731, %v756
    %v767 = vmul.f32 %v763, %v762
    %v768 = vmul.f32 %v764, %v762
    %v769 = vmul.f32 %v765, %v762
    %v770 = vmul.f32 %v766, %v762
    %v771 = vmax.f32 %v767, 0.0
    %v772 = vmax.f32 %v768, 0.0
    %v773 = vmax.f32 %v769, 0.0
    %v774 = vmax.f32 %v770, 0.0
    %v776 = vlaneseq
    %v777 = vshrl.u32 %v776, 7
    %v778 = vsub.s32 0, %v777
    %v779 = vrot.slane %v242, %v778
    %781 = vmatprep.subr.mxu0 0.0
    %782 = vmatpush1.msra.mxu0 %v241
    %783 = vmatprep.subr.mxu0 0.0
    %784 = vmatpush1.msra.mxu0 %v240
    %785 = vmatprep.subr.mxu0 0.0
    %786 = vmatpush1.msra.mxu0 %v239
    %787 = vmatprep.subr.mxu0 0.0
    %788 = vmatpush1.msra.mxu0 %v238
    %789 = vmatprep.subr.mxu0 0.0
    %790 = vmatpush1.msra.mxu0 %v237
    %791 = vmatprep.subr.mxu0 0.0
    %792 = vmatpush1.msra.mxu0 %v236
    %793 = vmatprep.subr.mxu0 0.0
    %794 = vmatpush1.msra.mxu0 %v235
    %795 = vmatprep.subr.mxu0 0.0
    %796 = vmatpush1.msra.mxu0 %v234
    %797 = vmatprep.subr.mxu0 0.0
    %798 = vmatpush1.msra.mxu0 %v233
    %799 = vmatprep.subr.mxu0 0.0
    %800 = vmatpush1.msra.mxu0 %v232
    %801 = vmatprep.subr.mxu0 0.0
    %802 = vmatpush1.msra.mxu0 %v231
    %803 = vmatprep.subr.mxu0 0.0
    %804 = vmatpush1.msra.mxu0 %v230
    %805 = vmatprep.subr.mxu0 0.0
    %806 = vmatpush1.msra.mxu0 %v229
    %807 = vmatprep.subr.mxu0 0.0
    %808 = vmatpush1.msra.mxu0 %v228
    %809 = vmatprep.subr.mxu0 0.0
    %810 = vmatpush1.msra.mxu0 %v227
    %811 = vmatprep.subr.mxu0 0.0
    %812 = vmatpush1.msra.mxu0 %v226
    %813 = vmatprep.subr.mxu0 0.0
    %814 = vmatpush2.msra.mxu0 0.0
    %815 = vmatprep.subr.mxu0 0.0
    %816 = vmatpush2.msra.mxu0 0.0
    %817 = vmatprep.subr.mxu0 0.0
    %818 = vmatpush2.msra.mxu0 0.0
    %819 = vmatprep.subr.mxu0 0.0
    %820 = vmatpush2.msra.mxu0 0.0
    %821 = vmatprep.subr.mxu0 0.0
    %822 = vmatpush2.msra.mxu0 0.0
    %823 = vmatprep.subr.mxu0 0.0
    %824 = vmatpush2.msra.mxu0 0.0
    %825 = vmatprep.subr.mxu0 0.0
    %826 = vmatpush2.msra.mxu0 0.0
    %827 = vmatprep.subr.mxu0 0.0
    %828 = vmatpush2.msra.mxu0 0.0
    %829 = vmatprep.subr.mxu0 0.0
    %830 = vmatpush2.msra.mxu0 0.0
    %831 = vmatprep.subr.mxu0 0.0
    %832 = vmatpush2.msra.mxu0 0.0
    %833 = vmatprep.subr.mxu0 0.0
    %834 = vmatpush2.msra.mxu0 0.0
    %835 = vmatprep.subr.mxu0 0.0
    %836 = vmatpush2.msra.mxu0 0.0
    %837 = vmatprep.subr.mxu0 0.0
    %838 = vmatpush2.msra.mxu0 0.0
    %839 = vmatprep.subr.mxu0 0.0
    %840 = vmatpush2.msra.mxu0 0.0
    %841 = vmatprep.subr.mxu0 0.0
    %842 = vmatpush2.msra.mxu0 0.0
    %843 = vmatprep.subr.mxu0 0.0
    %844 = vmatpush2.msra.mxu0 0.0
    %845 = vmatprep.mubr.f32.mxu0 0.0
    %846 = vmatmul.mubr.f32.gmra.mxu0 %v771
    %v847 = vpop.f32.mrf.mxu0
    %v848 = vadd.f32 %v779, %v847
    %v849 = vpop.f32.mrf.mxu0
    %850 = vmatprep.mubr.f32.mxu0 0.0
    %851 = vmatmul.mubr.f32.gmra.mxu0 %v772
    %v852 = vpop.f32.mrf.mxu0
    %v853 = vadd.f32 %v779, %v852
    %v854 = vpop.f32.mrf.mxu0
    %855 = vmatprep.mubr.f32.mxu0 0.0
    %856 = vmatmul.mubr.f32.gmra.mxu0 %v773
    %v857 = vpop.f32.mrf.mxu0
    %v858 = vadd.f32 %v779, %v857
    %v859 = vpop.f32.mrf.mxu0
    %860 = vmatprep.mubr.f32.mxu0 0.0
    %861 = vmatmul.mubr.f32.gmra.mxu0 %v774
    %v862 = vpop.f32.mrf.mxu0
    %v863 = vadd.f32 %v779, %v862
    %v864 = vpop.f32.mrf.mxu0
    %865 = vdwg.mxu0
    %866 = vst [vmem:[#allocation10] sm:$0xff] %v848
    %867 = vst [vmem:[#allocation10 + $0x8] sm:$0xff] %v853
    %868 = vst [vmem:[#allocation10 + $0x10] sm:$0xff] %v858
    %869 = vst [vmem:[#allocation10 + $0x18] sm:$0xff] %v863
    // Predicated region
    $region46: #{tpu_custom_call.1} parent=1 // pred_check
      _
    $region47: #{tpu_custom_call.1} parent=1 // pred_check_branch
      %871 = sbr.rel (0) target = $region49
    $region48: #{tpu_custom_call.1} parent=1 // pred_region
      %s873 = ssub.s32 512, 512
      %874 = vsyncadd [#allocation4], %s873
      %s875 = sshll.u32 [#allocation10], 4
      %s876 = int_to_ptr.vmem [resolvable:$true] %s875
      %881 = dma.vmem_to_hbm [thread:$0]  %s876, 512, %s7, [#allocation4], 128, 128, 8
    $region49: #{tpu_custom_call.1} parent=1 // pred_fallthru
      _
    // Predicated region
    $region50: #{tpu_custom_call.1} parent=1 // pred_check
      _
    $region51: #{tpu_custom_call.1} parent=1 // pred_check_branch
      %883 = sbr.rel (0) target = $region53
    $region52: #{tpu_custom_call.1} parent=1 // pred_region
      %884 = dma.done [#allocation4], 512
    $region53: #{tpu_custom_call.1} parent=1 // pred_fallthru
      _
    %885 = vsyncpa [#allocation3], 1
    %886 = vsyncpa [#allocation6], 1
    %887 = vsyncpa [#allocation9], 1
    %888 = vsyncpa [#allocation4], 1

</llo_original>
